<compile_context>
chip_gen: v7x
topology: tpu7x:2x2x1
jax: 0.10.0
libtpu: 0.0.40
codegen_flags: <defaults>
</compile_context>

<pallas_src>
import functools
import math

import jax
import jax.numpy as jnp
from jax import lax
from jax.experimental import pallas as pl
from jax.experimental.pallas import tpu as pltpu


# --------------------------------------------------------------------------
# helpers
# --------------------------------------------------------------------------

def _round_up(x, m):
    return (x + m - 1) // m * m


def _vmem_capacity_bytes():
    try:
        return int(pltpu.get_tpu_info().vmem_capacity_bytes)
    except Exception:
        return 64 * 1024 * 1024  # conservative (v7x-sized) fallback


def _pick_time_tile(T, per_step_bytes, fixed_bytes, budget, max_tile=32):
    """Timesteps per recurrent grid step, sized to the per-chip VMEM budget."""
    avail = budget - fixed_bytes
    tt = avail // per_step_bytes if per_step_bytes > 0 else max_tile
    return int(max(1, min(tt, max_tile, T)))


def _pick_row_tile(rows, max_tile=512):
    """Fixed MXU-friendly row tile for the hoisted projection (rows get padded)."""
    return int(min(_round_up(rows, 8), max_tile))


def _pick_col_tile(G, max_tile=1024):
    """Lane tile over the 4*Hp gate dimension of the projection output."""
    if G <= max_tile:
        return G
    best = 128
    for t in range(128, max_tile + 1, 128):
        if G % t == 0:
            best = t
    return best


def _pick_batch_tile(Bp):
    """Batch tile for the recurrence; >=2 tiles when Bp>=16 (v7x megacore)."""
    if Bp < 16:
        return Bp
    half = Bp // 2
    for cand in range(half - half % 8, 7, -8):
        if Bp % cand == 0:
            return cand
    return Bp


def _pad_gates_t(W, H, Hp):
    """(4H, X) torch-layout weight -> transposed, per-gate lane-padded (X, 4*Hp)."""
    Wt = W.T  # (X, 4H)
    blocks = [jnp.pad(Wt[:, k * H:(k + 1) * H], ((0, 0), (0, Hp - H)))
              for k in range(4)]
    return jnp.concatenate(blocks, axis=1)  # (X, 4*Hp)


def _pad_gates_bias(b, H, Hp):
    blocks = [jnp.pad(b[k * H:(k + 1) * H], (0, Hp - H)) for k in range(4)]
    return jnp.concatenate(blocks)  # (4*Hp,)


def _spec(shape, index_map, single_buffer):
    """BlockSpec, optionally single-buffered (for constant-index-map operands)."""
    if single_buffer:
        return pl.BlockSpec(shape, index_map, pipeline_mode=pl.Buffered(1))
    return pl.BlockSpec(shape, index_map)


def _with_single_buffer_fallback(fn, enable):
    if not enable:
        return fn(False)
    try:
        return fn(True)
    except Exception:
        # pipeline_mode=pl.Buffered(1) unsupported on this jax/libtpu: fall back
        # to default double buffering (correctness identical).
        return fn(False)


# --------------------------------------------------------------------------
# kernel 1: hoisted input projection  gx = x @ W_x.T + (b_x + b_h)
# --------------------------------------------------------------------------

def _input_proj_kernel(x_ref, wxt_ref, b_ref, gx_ref):
    gx_ref[...] = (
        jnp.dot(x_ref[...], wxt_ref[...], preferred_element_type=jnp.float32)
        + b_ref[...]).astype(gx_ref.dtype)


def _input_projection(x2d, wxt_p, bias_p, gx_dtype, row_tile, col_tile,
                      vmem_limit, single_buffer):
    rows, I = x2d.shape
    G = wxt_p.shape[1]
    nr = rows // row_tile
    nc = G // col_tile
    w_const = (nc == 1)  # single-buffer weights/bias only if their block never changes
    return pl.pallas_call(
        _input_proj_kernel,
        out_shape=jax.ShapeDtypeStruct((rows, G), gx_dtype),
        grid_spec=pltpu.PrefetchScalarGridSpec(
            num_scalar_prefetch=0,
            grid=(nr, nc),
            in_specs=[
                pl.BlockSpec((row_tile, I), lambda r, c: (r, 0)),
                _spec((I, col_tile), lambda r, c: (0, c), single_buffer and w_const),
                _spec((1, col_tile), lambda r, c: (0, c), single_buffer and w_const),
            ],
            out_specs=pl.BlockSpec((row_tile, col_tile), lambda r, c: (r, c)),
        ),
        compiler_params=pltpu.CompilerParams(
            dimension_semantics=("parallel", "parallel"),
            vmem_limit_bytes=vmem_limit),
    )(x2d, wxt_p, bias_p)


# --------------------------------------------------------------------------
# kernel 2: recurrence (tile_t timesteps per grid step, batch-tiled)
# --------------------------------------------------------------------------

def _lstm_recurrent_kernel(gx_ref, h0_ref, c0_ref, wht_ref,
                           out_ref, hT_ref, cT_ref,
                           h_sc, c_sc, *, hidden_p, tile_t, seq_len,
                           mxu_dtype, need_time_mask):
    Hp = hidden_p
    t_blk = pl.program_id(1)

    @pl.when(t_blk == 0)
    def _():
        h_sc[...] = h0_ref[...].astype(jnp.float32)
        c_sc[...] = c0_ref[...].astype(jnp.float32)

    wht = wht_ref[...]          # resident (Hp, 4*Hp) MXU operand
    h = h_sc[...]               # carry h/c in vregs across the unrolled tile
    c = c_sc[...]

    for i in range(tile_t):     # static full unroll; gx/out indices are static
        # g = gx[t] + h @ W_h.T   (biases already folded into gx)
        g = gx_ref[i].astype(jnp.float32) + jnp.dot(
            h.astype(mxu_dtype), wht, preferred_element_type=jnp.float32)
        # sigmoid(x) == 0.5*tanh(0.5*x)+0.5 : one EUP push instead of exp+recip.
        ig = 0.5 * jnp.tanh(0.5 * g[:, 0 * Hp:1 * Hp]) + 0.5
        fg = 0.5 * jnp.tanh(0.5 * g[:, 1 * Hp:2 * Hp]) + 0.5
        og = 0.5 * jnp.tanh(0.5 * g[:, 2 * Hp:3 * Hp]) + 0.5
        ng = jnp.tanh(g[:, 3 * Hp:4 * Hp])
        c_new = fg * c + ig * ng
        h_new = og * jnp.tanh(c_new)
        out_ref[i] = h_new.astype(out_ref.dtype)   # lane-dense (Hp % 128 == 0)
        if need_time_mask:
            # Padded trailing timesteps must not advance the carried state.
            m = (t_blk * tile_t + i < seq_len).astype(jnp.float32)
            h_new = m * h_new + (1.0 - m) * h
            c_new = m * c_new + (1.0 - m) * c
        h, c = h_new, c_new

    h_sc[...] = h               # one scratch write per tile (not per step)
    c_sc[...] = c

    @pl.when(t_blk == pl.num_programs(1) - 1)
    def _():
        hT_ref[...] = h.astype(hT_ref.dtype)
        cT_ref[...] = c.astype(cT_ref.dtype)


def _run_recurrence(gx, h0_p, c0_p, wht_p, out_dtype, h_dtype, c_dtype,
                    Hp, tile_t, b_tile, seq_len, mxu_dtype,
                    vmem_limit, single_buffer):
    T_pad, Bp, G = gx.shape
    nt = T_pad // tile_t
    nb = Bp // b_tile
    need_mask = (T_pad != seq_len)
    batch_const = (nb == 1)

    kernel = functools.partial(
        _lstm_recurrent_kernel, hidden_p=Hp, tile_t=tile_t, seq_len=seq_len,
        mxu_dtype=mxu_dtype, need_time_mask=need_mask)

    out_shapes = (
        jax.ShapeDtypeStruct((T_pad, Bp, Hp), out_dtype),   # stacked h_t
        jax.ShapeDtypeStruct((Bp, Hp), h_dtype),            # final h
        jax.ShapeDtypeStruct((Bp, Hp), c_dtype),            # final c
    )

    grid_spec = pltpu.PrefetchScalarGridSpec(
        num_scalar_prefetch=0,
        grid=(nb, nt),
        in_specs=[
            pl.BlockSpec((tile_t, b_tile, G), lambda b, t: (t, b, 0)),   # gx block
            _spec((b_tile, Hp), lambda b, t: (b, 0), single_buffer and batch_const),
            _spec((b_tile, Hp), lambda b, t: (b, 0), single_buffer and batch_const),
            _spec((Hp, G), lambda b, t: (0, 0), single_buffer),          # W_h.T resident
        ],
        out_specs=[
            pl.BlockSpec((tile_t, b_tile, Hp), lambda b, t: (t, b, 0)),
            pl.BlockSpec((b_tile, Hp), lambda b, t: (b, 0)),
            pl.BlockSpec((b_tile, Hp), lambda b, t: (b, 0)),
        ],
        scratch_shapes=[
            pltpu.VMEM((b_tile, Hp), jnp.float32),   # h carry across time tiles
            pltpu.VMEM((b_tile, Hp), jnp.float32),   # c carry across time tiles
        ],
    )

    return pl.pallas_call(
        kernel,
        out_shape=out_shapes,
        grid_spec=grid_spec,
        compiler_params=pltpu.CompilerParams(
            dimension_semantics=("parallel", "arbitrary"),   # batch parallel, time sequential
            vmem_limit_bytes=vmem_limit),
    )(gx, h0_p, c0_p, wht_p)


# --------------------------------------------------------------------------
# wrapper: WeightDropLSTMCustom.forward
# --------------------------------------------------------------------------

def weight_drop_lstm_forward(input_, states, W_x, W_h, b_x, b_h,
                             weight_drop=0.0, training=False, dropout_key=None,
                             mxu_dtype=jnp.bfloat16, max_time_tile=32,
                             single_buffer_resident=True):
    """Pallas equivalent of WeightDropLSTMCustom.forward.

    input_: (T, B, input_size); states: (h0, c0) each (B, hidden_size).
    Returns (outputs (T, B, H), (h_T, c_T)).
    """
    h0, c0 = states
    T, B, I = input_.shape
    H = W_h.shape[1]
    assert W_x.shape == (4 * H, I)
    assert W_h.shape == (4 * H, H)

    if T == 0:
        return jnp.zeros((0, B, H), input_.dtype), (h0, c0)

    # Weight dropout on W_h (torch F.dropout semantics: inverted dropout),
    # applied in plain JAX outside the kernels.
    if training and weight_drop > 0.0:
        if dropout_key is None:
            raise ValueError(
                "dropout_key is required when training=True and weight_drop > 0")
        keep = jax.random.bernoulli(dropout_key, 1.0 - weight_drop, W_h.shape)
        W_h = jnp.where(keep, W_h / (1.0 - weight_drop), jnp.zeros_like(W_h))

    # ---- lane / sublane aligned padding ----
    Hp = _round_up(H, 128)          # gate width padded to 128 lanes
    Bp = _round_up(B, 8)            # batch padded to 8 sublanes
    G = 4 * Hp
    b_tile = _pick_batch_tile(Bp)

    gx_dtype = jnp.dtype(mxu_dtype)      # bf16 gx halves the HBM round-trip
    out_dtype = input_.dtype

    wxt_p = _pad_gates_t(W_x, H, Hp).astype(mxu_dtype)                    # (I, 4Hp)
    wht_p = jnp.pad(_pad_gates_t(W_h, H, Hp),
                    ((0, Hp - H), (0, 0))).astype(mxu_dtype)              # (Hp, 4Hp)
    bias_p = _pad_gates_bias((b_x + b_h).astype(jnp.float32), H, Hp).reshape(1, G)

    h0_p = jnp.pad(h0, ((0, Bp - B), (0, Hp - H))).astype(jnp.float32)
    c0_p = jnp.pad(c0, ((0, Bp - B), (0, Hp - H))).astype(jnp.float32)

    # ---- per-chip VMEM budget -> tile_t / vmem limits ----
    cap = _vmem_capacity_bytes()
    budget = int(cap * 0.70)
    vmem_limit = int(cap * 0.85)

    isz_w = jnp.dtype(mxu_dtype).itemsize
    isz_gx = jnp.dtype(gx_dtype).itemsize
    isz_out = jnp.dtype(out_dtype).itemsize
    isz_h = jnp.dtype(h0.dtype).itemsize
    fixed = (Hp * G * isz_w                        # resident W_h.T (single buffer)
             + 2 * 2 * b_tile * Hp * 4             # h0/c0 (<=2 f32 buffers each)
             + 2 * 2 * b_tile * Hp * isz_h         # hT/cT output buffers
             + 2 * b_tile * Hp * 4                 # f32 h/c scratch
             + (2 << 20))                          # Mosaic internal margin
    per_t = 2 * b_tile * (G * isz_gx + Hp * isz_out)   # double-buffered gx + out
    tile_t = _pick_time_tile(T, per_t, fixed, budget, max_tile=max_time_tile)
    T_pad = pl.cdiv(T, tile_t) * tile_t

    # ---- pad x in time / batch, hoisted input projection ----
    x_p = jnp.pad(input_, ((0, T_pad - T), (0, Bp - B), (0, 0))).astype(mxu_dtype)
    rows = T_pad * Bp
    row_tile = _pick_row_tile(rows)
    rows_pad = pl.cdiv(rows, row_tile) * row_tile
    x2d = x_p.reshape(rows, I)
    if rows_pad != rows:
        x2d = jnp.pad(x2d, ((0, rows_pad - rows), (0, 0)))
    col_tile = _pick_col_tile(G)

    gx = _with_single_buffer_fallback(
        lambda sb: _input_projection(x2d, wxt_p, bias_p, gx_dtype,
                                     row_tile, col_tile, vmem_limit, sb),
        single_buffer_resident)
    gx = gx[:rows].reshape(T_pad, Bp, G)

    # ---- recurrent kernel ----
    out_p, hT_p, cT_p = _with_single_buffer_fallback(
        lambda sb: _run_recurrence(gx, h0_p, c0_p, wht_p, out_dtype,
                                   h0.dtype, c0.dtype, Hp, tile_t, b_tile,
                                   T, mxu_dtype, vmem_limit, sb),
        single_buffer_resident)

    outputs = out_p[:T, :B, :H]
    return outputs, (hT_p[:B, :H], cT_p[:B, :H])


# --------------------------------------------------------------------------
# pure-JAX reference (mirrors the PyTorch lstm_step loop)
# --------------------------------------------------------------------------

def _reference_forward(input_, states, W_x, W_h, b_x, b_h,
                       mxu_dtype=jnp.float32):
    h, c = states
    Wxt = W_x.T.astype(mxu_dtype)
    Wht = W_h.T.astype(mxu_dtype)

    def step(carry, x_t):
        h, c = carry
        gx = jnp.dot(x_t.astype(mxu_dtype), Wxt,
                     preferred_element_type=jnp.float32) + b_x
        gh = jnp.dot(h.astype(mxu_dtype), Wht,
                     preferred_element_type=jnp.float32) + b_h
        xi, xf, xo, xn = jnp.split(gx, 4, axis=1)
        hi, hf, ho, hn = jnp.split(gh, 4, axis=1)
        ig = jax.nn.sigmoid(xi + hi)
        fg = jax.nn.sigmoid(xf + hf)
        og = jax.nn.sigmoid(xo + ho)
        ng = jnp.tanh(xn + hn)
        c = fg * c + ig * ng
        h = og * jnp.tanh(c)
        return (h, c), h

    (h, c), outs = lax.scan(step, (h, c), input_)
    return outs, (h, c)


# --------------------------------------------------------------------------
# test
# --------------------------------------------------------------------------

if __name__ == "__main__":
    key = jax.random.PRNGKey(0)

    def make_case(key, T, B, I, H):
        k_x, k_h, k_c, k_wx, k_wh, k_bx, k_bh = jax.random.split(key, 7)
        stdv = 1.0 / math.sqrt(H)
        W_x = jax.random.uniform(k_wx, (4 * H, I), jnp.float32, -stdv, stdv)
        W_h = jax.random.uniform(k_wh, (4 * H, H), jnp.float32, -stdv, stdv)
        b_x = jax.random.uniform(k_bx, (4 * H,), jnp.float32, -stdv, stdv)
        b_h = jax.random.uniform(k_bh, (4 * H,), jnp.float32, -stdv, stdv)
        x = jax.random.normal(k_x, (T, B, I), jnp.float32)
        h0 = jax.random.normal(k_h, (B, H), jnp.float32)
        c0 = jax.random.normal(k_c, (B, H), jnp.float32)
        return x, h0, c0, W_x, W_h, b_x, b_h

    def check(x, h0, c0, W_x, W_h, b_x, b_h, mxu_dtype, atol, rtol, **kw):
        outs, (hT, cT) = weight_drop_lstm_forward(
            x, (h0, c0), W_x, W_h, b_x, b_h,
            weight_drop=0.0, training=False, mxu_dtype=mxu_dtype, **kw)
        jax.block_until_ready((outs, hT, cT))
        r_outs, (r_h, r_c) = _reference_forward(
            x, (h0, c0), W_x, W_h, b_x, b_h, mxu_dtype=mxu_dtype)
        assert outs.shape == r_outs.shape
        assert hT.shape == r_h.shape and cT.shape == r_c.shape
        assert jnp.allclose(outs, r_outs, atol=atol, rtol=rtol)
        assert jnp.allclose(hT, r_h, atol=atol, rtol=rtol)
        assert jnp.allclose(cT, r_c, atol=atol, rtol=rtol)

    k1, k2, k3 = jax.random.split(key, 3)

    # 1) f32 MXU path, "nice" shapes.
    case1 = make_case(k1, T=8, B=8, I=16, H=32)
    check(*case1, mxu_dtype=jnp.float32, atol=5e-3, rtol=5e-3)

    # 2) bf16 MXU path (default; gx stored in bf16) vs bf16 reference.
    check(*case1, mxu_dtype=jnp.bfloat16, atol=2e-2, rtol=2e-2)

    # 3) f32, ragged shapes exercising batch / hidden padding logic.
    case2 = make_case(k2, T=6, B=5, I=20, H=48)
    check(*case2, mxu_dtype=jnp.float32, atol=5e-3, rtol=5e-3)

    # 4) batch-tiled (Bp=24 -> 3 batch tiles) + time-padded (T=5, tile_t=2) path.
    case3 = make_case(k3, T=5, B=20, I=12, H=16)
    check(*case3, mxu_dtype=jnp.float32, atol=5e-3, rtol=5e-3, max_time_tile=2)

    # 5) weight_drop path (training=True): same mask built outside for the ref.
    x, h0, c0, W_x, W_h, b_x, b_h = case1
    dk = jax.random.PRNGKey(42)
    p = 0.5
    keep = jax.random.bernoulli(dk, 1.0 - p, W_h.shape)
    W_h_dropped = jnp.where(keep, W_h / (1.0 - p), jnp.zeros_like(W_h))
    outs, (hT, cT) = weight_drop_lstm_forward(
        x, (h0, c0), W_x, W_h, b_x, b_h,
        weight_drop=p, training=True, dropout_key=dk, mxu_dtype=jnp.float32)
    jax.block_until_ready((outs, hT, cT))
    r_outs, (r_h, r_c) = _reference_forward(
        x, (h0, c0), W_x, W_h_dropped, b_x, b_h, mxu_dtype=jnp.float32)
    assert jnp.allclose(outs, r_outs, atol=5e-3, rtol=5e-3)
    assert jnp.allclose(hT, r_h, atol=5e-3, rtol=5e-3)
    assert jnp.allclose(cT, r_c, atol=5e-3, rtol=5e-3)

    print("KERNEL_OK")
</pallas_src>

<mosaic_0001>
module attributes {stable_mosaic.version = 11 : i64} {
  func.func @_input_proj_kernel(%arg0: i32, %arg1: i32, %arg2: memref<64x16xf32, #tpu.memory_space<vmem>>, %arg3: memref<16x512xf32, #tpu.memory_space<vmem>>, %arg4: memref<1x512xf32, #tpu.memory_space<vmem>>, %arg5: memref<64x512xf32, #tpu.memory_space<vmem>>) attributes {dimension_semantics = [#tpu.dimension_semantics<parallel>, #tpu.dimension_semantics<parallel>], iteration_bounds = array<i64: 1, 1>, scalar_prefetch = 0 : i64, scratch_operands = 0 : i64, tpu.core_type = #tpu.core_type<tc>, window_params = [{transform_indices = @transform_0, window_bounds = array<i64: 64, 16>}, {pipeline_mode = #tpu.pipeline_mode<synchronous>, transform_indices = @transform_1, window_bounds = array<i64: 16, 512>}, {pipeline_mode = #tpu.pipeline_mode<synchronous>, transform_indices = @transform_2, window_bounds = array<i64: 1, 512>}, {transform_indices = @transform_3, window_bounds = array<i64: 64, 512>}]} {
    %c0 = arith.constant 0 : index
    %c0_0 = arith.constant 0 : index
    %0 = vector.load %arg2[%c0, %c0_0] : memref<64x16xf32, #tpu.memory_space<vmem>>, vector<64x16xf32>
    %c0_1 = arith.constant 0 : index
    %c0_2 = arith.constant 0 : index
    %1 = vector.load %arg3[%c0_1, %c0_2] : memref<16x512xf32, #tpu.memory_space<vmem>>, vector<16x512xf32>
    %cst = arith.constant dense<0.000000e+00> : vector<64x512xf32>
    %2 = tpu.matmul %0, %1, %cst {dimension_numbers = #tpu.dot_dimension_numbers<[1], [0], [0], [1], [0, 0, 1, 1], [], []>} : vector<64x16xf32>, vector<16x512xf32>, vector<64x512xf32> -> vector<64x512xf32>
    %c0_3 = arith.constant 0 : index
    %c0_4 = arith.constant 0 : index
    %3 = vector.load %arg4[%c0_3, %c0_4] : memref<1x512xf32, #tpu.memory_space<vmem>>, vector<1x512xf32>
    %4 = vector.broadcast %3 : vector<1x512xf32> to vector<64x512xf32>
    %5 = arith.addf %2, %4 : vector<64x512xf32>
    %c0_5 = arith.constant 0 : index
    %c0_6 = arith.constant 0 : index
    %6 = vector.load %arg5[%c0_5, %c0_6] : memref<64x512xf32, #tpu.memory_space<vmem>>, vector<64x512xf32>
    tpu.vector_store %arg5[%c0_5, %c0_6], %5 {strides = array<i32>} : memref<64x512xf32, #tpu.memory_space<vmem>>, vector<64x512xf32>,
    return
  }
  func.func @transform_0(%arg0: i32, %arg1: i32) -> (i32, i32) {
    %c0_i32 = arith.constant 0 : i32
    %c0_i32_0 = arith.constant 0 : i32
    return %arg0, %c0_i32 : i32, i32
  }
  func.func @transform_1(%arg0: i32, %arg1: i32) -> (i32, i32) {
    %c0_i32 = arith.constant 0 : i32
    %c0_i32_0 = arith.constant 0 : i32
    return %c0_i32, %arg1 : i32, i32
  }
  func.func @transform_2(%arg0: i32, %arg1: i32) -> (i32, i32) {
    %c0_i32 = arith.constant 0 : i32
    %c0_i32_0 = arith.constant 0 : i32
    return %c0_i32, %arg1 : i32, i32
  }
  func.func @transform_3(%arg0: i32, %arg1: i32) -> (i32, i32) {
    %c0_i32 = arith.constant 0 : i32
    return %arg0, %arg1 : i32, i32
  }
}

module attributes {stable_mosaic.version = 11 : i64} {
  func.func @_input_proj_kernel(%arg0: i32, %arg1: i32, %arg2: memref<64x16xf32, #tpu.memory_space<vmem>>, %arg3: memref<16x512xf32, #tpu.memory_space<vmem>>, %arg4: memref<1x512xf32, #tpu.memory_space<vmem>>, %arg5: memref<64x512xf32, #tpu.memory_space<vmem>>) attributes {dimension_semantics = [#tpu.dimension_semantics<parallel>, #tpu.dimension_semantics<parallel>], iteration_bounds = array<i64: 1, 1>, scalar_prefetch = 0 : i64, scratch_operands = 0 : i64, tpu.core_type = #tpu.core_type<tc>, window_params = [{transform_indices = @transform_0, window_bounds = array<i64: 64, 16>}, {transform_indices = @transform_1, window_bounds = array<i64: 16, 512>}, {transform_indices = @transform_2, window_bounds = array<i64: 1, 512>}, {transform_indices = @transform_3, window_bounds = array<i64: 64, 512>}]} {
    %c0 = arith.constant 0 : index
    %c0_0 = arith.constant 0 : index
    %0 = vector.load %arg2[%c0, %c0_0] : memref<64x16xf32, #tpu.memory_space<vmem>>, vector<64x16xf32>
    %c0_1 = arith.constant 0 : index
    %c0_2 = arith.constant 0 : index
    %1 = vector.load %arg3[%c0_1, %c0_2] : memref<16x512xf32, #tpu.memory_space<vmem>>, vector<16x512xf32>
    %cst = arith.constant dense<0.000000e+00> : vector<64x512xf32>
    %2 = tpu.matmul %0, %1, %cst {dimension_numbers = #tpu.dot_dimension_numbers<[1], [0], [0], [1], [0, 0, 1, 1], [], []>} : vector<64x16xf32>, vector<16x512xf32>, vector<64x512xf32> -> vector<64x512xf32>
    %c0_3 = arith.constant 0 : index
    %c0_4 = arith.constant 0 : index
    %3 = vector.load %arg4[%c0_3, %c0_4] : memref<1x512xf32, #tpu.memory_space<vmem>>, vector<1x512xf32>
    %4 = vector.broadcast %3 : vector<1x512xf32> to vector<64x512xf32>
    %5 = arith.addf %2, %4 : vector<64x512xf32>
    %c0_5 = arith.constant 0 : index
    %c0_6 = arith.constant 0 : index
    %6 = vector.load %arg5[%c0_5, %c0_6] : memref<64x512xf32, #tpu.memory_space<vmem>>, vector<64x512xf32>
    tpu.vector_store %arg5[%c0_5, %c0_6], %5 {strides = array<i32>} : memref<64x512xf32, #tpu.memory_space<vmem>>, vector<64x512xf32>,
    return
  }
  func.func @transform_0(%arg0: i32, %arg1: i32) -> (i32, i32) {
    %c0_i32 = arith.constant 0 : i32
    %c0_i32_0 = arith.constant 0 : i32
    return %arg0, %c0_i32 : i32, i32
  }
  func.func @transform_1(%arg0: i32, %arg1: i32) -> (i32, i32) {
    %c0_i32 = arith.constant 0 : i32
    %c0_i32_0 = arith.constant 0 : i32
    return %c0_i32, %arg1 : i32, i32
  }
  func.func @transform_2(%arg0: i32, %arg1: i32) -> (i32, i32) {
    %c0_i32 = arith.constant 0 : i32
    %c0_i32_0 = arith.constant 0 : i32
    return %c0_i32, %arg1 : i32, i32
  }
  func.func @transform_3(%arg0: i32, %arg1: i32) -> (i32, i32) {
    %c0_i32 = arith.constant 0 : i32
    return %arg0, %arg1 : i32, i32
  }
}

</mosaic_0001>

<llo_original>
// kernel: tpu_custom_call.1
$region0: #{tpu_custom_call.1}
  #allocation0 [shape = 'u32[]', space=smem, size = 0x4, offset = 0x4, fixed_abs, tag = 'smem constant byte address 0x4 - core index']
  #allocation1 [shape = 'u32[144,128]{1,0:T(1,128)}', space=vmem, size = 0x12000, scoped, tag = 'internal scratch']
  %s0 = inlined_call_operand.vmem [shape: f32[64,16], index: 0, kind: input, shape index: {}]
  %s1 = inlined_call_operand.vmem [shape: f32[16,512], index: 1, kind: input, shape index: {}]
  %s2 = inlined_call_operand.vmem [shape: f32[1,512], index: 2, kind: input, shape index: {}]
  %s3 = inlined_call_operand.hbm [shape: f32[64,512], index: 3, kind: output, shape index: {}]
  %s4 = sld [smem:[#allocation0]]
  $region22: #{tpu_custom_call.1} parent=0
    _
  %s6 = ssub.s32 1, %s4
  %s7 = scalar_select 0, %s6, %s4
  $region1: #{tpu_custom_call.1} parent=0
    #allocation2 [shape = 'u8[131072]{0}', space=vmem, size = 0x20000, scoped, tag = 'output window, operand 0, single buffered']
    #allocation3 [shape = 's32[1]{0}', space=sflag, size = 0x4, scoped, tag = 'scoped memory for tpu_custom_call.1']
    %8 = vsyncpa [#allocation3], 0
    // Predicated region
    $region2: #{tpu_custom_call.1} parent=1 // pred_check
      _
    $region3: #{tpu_custom_call.1} parent=1 // pred_check_branch
      %10 = sbr.rel (0) target = $region5
    $region4: #{tpu_custom_call.1} parent=1 // pred_region
      _
    $region5: #{tpu_custom_call.1} parent=1 // pred_fallthru
      _
    // Predicated region
    $region6: #{tpu_custom_call.1} parent=1 // pred_check
      _
    $region7: #{tpu_custom_call.1} parent=1 // pred_check_branch
      %12 = sbr.rel (0) target = $region9
    $region8: #{tpu_custom_call.1} parent=1 // pred_region
      _
    $region9: #{tpu_custom_call.1} parent=1 // pred_fallthru
      _
    // Predicated region
    $region10: #{tpu_custom_call.1} parent=1 // pred_check
      _
    $region11: #{tpu_custom_call.1} parent=1 // pred_check_branch
      %14 = sbr.rel (0) target = $region13
    $region12: #{tpu_custom_call.1} parent=1 // pred_region
      _
    $region13: #{tpu_custom_call.1} parent=1 // pred_fallthru
      _
    %v15 = vld [vmem:[%s0] sm:$0xff]
    %v16 = vld [vmem:[%s0 + $0x8] sm:$0xff]
    %v17 = vld [vmem:[%s0 + $0x10] sm:$0xff]
    %v18 = vld [vmem:[%s0 + $0x18] sm:$0xff]
    %v19 = vld [vmem:[%s0 + $0x20] sm:$0xff]
    %v20 = vld [vmem:[%s0 + $0x28] sm:$0xff]
    %v21 = vld [vmem:[%s0 + $0x30] sm:$0xff]
    %v22 = vld [vmem:[%s0 + $0x38] sm:$0xff]
    %v23 = vld [vmem:[%s1] sm:$0xff]
    %v24 = vld [vmem:[%s1 + $0x8] sm:$0xff]
    %v25 = vld [vmem:[%s1 + $0x10] sm:$0xff]
    %v26 = vld [vmem:[%s1 + $0x18] sm:$0xff]
    %v27 = vld [vmem:[%s1 + $0x20] sm:$0xff]
    %v28 = vld [vmem:[%s1 + $0x28] sm:$0xff]
    %v29 = vld [vmem:[%s1 + $0x30] sm:$0xff]
    %v30 = vld [vmem:[%s1 + $0x38] sm:$0xff]
    %v31 = vld [vmem:[%s2] sm:$0xf]
    %v33 = vlaneseq
    %v34 = vshrl.u32 %v33, 7
    %v35 = vsub.s32 0, %v34
    %v36 = vrot.slane %v31, %v35
    %v37 = vlaneseq
    %v38 = vshrl.u32 %v37, 7
    %v39 = vsub.s32 1, %v38
    %v40 = vrot.slane %v31, %v39
    %v41 = vlaneseq
    %v42 = vshrl.u32 %v41, 7
    %v43 = vsub.s32 2, %v42
    %v44 = vrot.slane %v31, %v43
    %v45 = vlaneseq
    %v46 = vshrl.u32 %v45, 7
    %v47 = vsub.s32 3, %v46
    %v48 = vrot.slane %v31, %v47
    %vm53 = vcmask 130048
    %v55 = vsel %vm53, %v15, 0
    %v58 = vsel %vm53, %v16, 0
    %v61 = vsel %vm53, %v17, 0
    %v64 = vsel %vm53, %v18, 0
    %v67 = vsel %vm53, %v19, 0
    %v70 = vsel %vm53, %v20, 0
    %v73 = vsel %vm53, %v21, 0
    %v76 = vsel %vm53, %v22, 0
    %78 = vmatprep.subr.mxu0 %v24
    %79 = vmatpush1.msra.mxu0 %v23
    %80 = vmatprep.subr.mxu0 %v28
    %81 = vmatpush1.msra.mxu0 %v27
    %82 = vmatprep.subr.mxu0 0.0
    %83 = vmatpush1.msra.mxu0 0.0
    %84 = vmatprep.subr.mxu0 0.0
    %85 = vmatpush1.msra.mxu0 0.0
    %86 = vmatprep.subr.mxu0 0.0
    %87 = vmatpush1.msra.mxu0 0.0
    %88 = vmatprep.subr.mxu0 0.0
    %89 = vmatpush1.msra.mxu0 0.0
    %90 = vmatprep.subr.mxu0 0.0
    %91 = vmatpush1.msra.mxu0 0.0
    %92 = vmatprep.subr.mxu0 0.0
    %93 = vmatpush1.msra.mxu0 0.0
    %94 = vmatprep.subr.mxu0 0.0
    %95 = vmatpush1.msra.mxu0 0.0
    %96 = vmatprep.subr.mxu0 0.0
    %97 = vmatpush1.msra.mxu0 0.0
    %98 = vmatprep.subr.mxu0 0.0
    %99 = vmatpush1.msra.mxu0 0.0
    %100 = vmatprep.subr.mxu0 0.0
    %101 = vmatpush1.msra.mxu0 0.0
    %102 = vmatprep.subr.mxu0 0.0
    %103 = vmatpush1.msra.mxu0 0.0
    %104 = vmatprep.subr.mxu0 0.0
    %105 = vmatpush1.msra.mxu0 0.0
    %106 = vmatprep.subr.mxu0 0.0
    %107 = vmatpush1.msra.mxu0 0.0
    %108 = vmatprep.subr.mxu0 0.0
    %109 = vmatpush1.msra.mxu0 0.0
    %110 = vmatprep.subr.mxu0 0.0
    %111 = vmatpush1.msra.mxu0 0.0
    %112 = vmatprep.subr.mxu0 0.0
    %113 = vmatpush1.msra.mxu0 0.0
    %114 = vmatprep.subr.mxu0 0.0
    %115 = vmatpush1.msra.mxu0 0.0
    %116 = vmatprep.subr.mxu0 0.0
    %117 = vmatpush1.msra.mxu0 0.0
    %118 = vmatprep.subr.mxu0 0.0
    %119 = vmatpush1.msra.mxu0 0.0
    %120 = vmatprep.subr.mxu0 0.0
    %121 = vmatpush1.msra.mxu0 0.0
    %122 = vmatprep.subr.mxu0 0.0
    %123 = vmatpush1.msra.mxu0 0.0
    %124 = vmatprep.subr.mxu0 0.0
    %125 = vmatpush1.msra.mxu0 0.0
    %126 = vmatprep.subr.mxu0 0.0
    %127 = vmatpush1.msra.mxu0 0.0
    %128 = vmatprep.subr.mxu0 0.0
    %129 = vmatpush1.msra.mxu0 0.0
    %130 = vmatprep.subr.mxu0 0.0
    %131 = vmatpush1.msra.mxu0 0.0
    %132 = vmatprep.subr.mxu0 0.0
    %133 = vmatpush1.msra.mxu0 0.0
    %134 = vmatprep.subr.mxu0 0.0
    %135 = vmatpush1.msra.mxu0 0.0
    %136 = vmatprep.subr.mxu0 0.0
    %137 = vmatpush1.msra.mxu0 0.0
    %138 = vmatprep.subr.mxu0 0.0
    %139 = vmatpush1.msra.mxu0 0.0
    %140 = vmatprep.subr.mxu0 0.0
    %141 = vmatpush1.msra.mxu0 0.0
    %142 = vmatprep.mubr.f32.mxu0 0.0
    %143 = vmatmul.mubr.f32.gmra.mrb[0].mxu0 %v55
    %v144 = vpop.f32.mrb[0].mxu0
    %v145 = vadd.f32 %v36, %v144
    %v146 = vpop.f32.mrb[0].mxu0
    %v147 = vadd.f32 %v40, %v146
    %148 = vmatprep.mubr.f32.mxu0 0.0
    %149 = vmatmul.mubr.f32.gmra.mrb[0].mxu0 %v58
    %v150 = vpop.f32.mrb[0].mxu0
    %v151 = vadd.f32 %v36, %v150
    %v152 = vpop.f32.mrb[0].mxu0
    %v153 = vadd.f32 %v40, %v152
    %154 = vmatprep.mubr.f32.mxu0 0.0
    %155 = vmatmul.mubr.f32.gmra.mrb[0].mxu0 %v61
    %v156 = vpop.f32.mrb[0].mxu0
    %v157 = vadd.f32 %v36, %v156
    %v158 = vpop.f32.mrb[0].mxu0
    %v159 = vadd.f32 %v40, %v158
    %160 = vmatprep.mubr.f32.mxu0 0.0
    %161 = vmatmul.mubr.f32.gmra.mrb[0].mxu0 %v64
    %v162 = vpop.f32.mrb[0].mxu0
    %v163 = vadd.f32 %v36, %v162
    %v164 = vpop.f32.mrb[0].mxu0
    %v165 = vadd.f32 %v40, %v164
    %166 = vmatprep.mubr.f32.mxu0 0.0
    %167 = vmatmul.mubr.f32.gmra.mrb[0].mxu0 %v67
    %v168 = vpop.f32.mrb[0].mxu0
    %v169 = vadd.f32 %v36, %v168
    %v170 = vpop.f32.mrb[0].mxu0
    %v171 = vadd.f32 %v40, %v170
    %172 = vmatprep.mubr.f32.mxu0 0.0
    %173 = vmatmul.mubr.f32.gmra.mrb[0].mxu0 %v70
    %v174 = vpop.f32.mrb[0].mxu0
    %v175 = vadd.f32 %v36, %v174
    %v176 = vpop.f32.mrb[0].mxu0
    %v177 = vadd.f32 %v40, %v176
    %178 = vmatprep.mubr.f32.mxu0 0.0
    %179 = vmatmul.mubr.f32.gmra.mrb[0].mxu0 %v73
    %v180 = vpop.f32.mrb[0].mxu0
    %v181 = vadd.f32 %v36, %v180
    %v182 = vpop.f32.mrb[0].mxu0
    %v183 = vadd.f32 %v40, %v182
    %184 = vmatprep.mubr.f32.mxu0 0.0
    %185 = vmatmul.mubr.f32.gmra.mrb[0].mxu0 %v76
    %v186 = vpop.f32.mrb[0].mxu0
    %v187 = vadd.f32 %v36, %v186
    %v188 = vpop.f32.mrb[0].mxu0
    %v189 = vadd.f32 %v40, %v188
    %190 = vdwg.mxu0
    %191 = vmatprep.subr.mxu0 %v26
    %192 = vmatpush1.msra.mxu0 %v25
    %193 = vmatprep.subr.mxu0 %v30
    %194 = vmatpush1.msra.mxu0 %v29
    %195 = vmatprep.subr.mxu0 0.0
    %196 = vmatpush1.msra.mxu0 0.0
    %197 = vmatprep.subr.mxu0 0.0
    %198 = vmatpush1.msra.mxu0 0.0
    %199 = vmatprep.subr.mxu0 0.0
    %200 = vmatpush1.msra.mxu0 0.0
    %201 = vmatprep.subr.mxu0 0.0
    %202 = vmatpush1.msra.mxu0 0.0
    %203 = vmatprep.subr.mxu0 0.0
    %204 = vmatpush1.msra.mxu0 0.0
    %205 = vmatprep.subr.mxu0 0.0
    %206 = vmatpush1.msra.mxu0 0.0
    %207 = vmatprep.subr.mxu0 0.0
    %208 = vmatpush1.msra.mxu0 0.0
    %209 = vmatprep.subr.mxu0 0.0
    %210 = vmatpush1.msra.mxu0 0.0
    %211 = vmatprep.subr.mxu0 0.0
    %212 = vmatpush1.msra.mxu0 0.0
    %213 = vmatprep.subr.mxu0 0.0
    %214 = vmatpush1.msra.mxu0 0.0
    %215 = vmatprep.subr.mxu0 0.0
    %216 = vmatpush1.msra.mxu0 0.0
    %217 = vmatprep.subr.mxu0 0.0
    %218 = vmatpush1.msra.mxu0 0.0
    %219 = vmatprep.subr.mxu0 0.0
    %220 = vmatpush1.msra.mxu0 0.0
    %221 = vmatprep.subr.mxu0 0.0
    %222 = vmatpush1.msra.mxu0 0.0
    %223 = vmatprep.subr.mxu0 0.0
    %224 = vmatpush1.msra.mxu0 0.0
    %225 = vmatprep.subr.mxu0 0.0
    %226 = vmatpush1.msra.mxu0 0.0
    %227 = vmatprep.subr.mxu0 0.0
    %228 = vmatpush1.msra.mxu0 0.0
    %229 = vmatprep.subr.mxu0 0.0
    %230 = vmatpush1.msra.mxu0 0.0
    %231 = vmatprep.subr.mxu0 0.0
    %232 = vmatpush1.msra.mxu0 0.0
    %233 = vmatprep.subr.mxu0 0.0
    %234 = vmatpush1.msra.mxu0 0.0
    %235 = vmatprep.subr.mxu0 0.0
    %236 = vmatpush1.msra.mxu0 0.0
    %237 = vmatprep.subr.mxu0 0.0
    %238 = vmatpush1.msra.mxu0 0.0
    %239 = vmatprep.subr.mxu0 0.0
    %240 = vmatpush1.msra.mxu0 0.0
    %241 = vmatprep.subr.mxu0 0.0
    %242 = vmatpush1.msra.mxu0 0.0
    %243 = vmatprep.subr.mxu0 0.0
    %244 = vmatpush1.msra.mxu0 0.0
    %245 = vmatprep.subr.mxu0 0.0
    %246 = vmatpush1.msra.mxu0 0.0
    %247 = vmatprep.subr.mxu0 0.0
    %248 = vmatpush1.msra.mxu0 0.0
    %249 = vmatprep.subr.mxu0 0.0
    %250 = vmatpush1.msra.mxu0 0.0
    %251 = vmatprep.subr.mxu0 0.0
    %252 = vmatpush1.msra.mxu0 0.0
    %253 = vmatprep.subr.mxu0 0.0
    %254 = vmatpush1.msra.mxu0 0.0
    %255 = vmatprep.mubr.f32.mxu0 0.0
    %256 = vmatmul.mubr.f32.gmra.mrb[0].mxu0 %v55
    %v257 = vpop.f32.mrb[0].mxu0
    %v258 = vadd.f32 %v44, %v257
    %v259 = vpop.f32.mrb[0].mxu0
    %v260 = vadd.f32 %v48, %v259
    %261 = vmatprep.mubr.f32.mxu0 0.0
    %262 = vmatmul.mubr.f32.gmra.mrb[0].mxu0 %v58
    %v263 = vpop.f32.mrb[0].mxu0
    %v264 = vadd.f32 %v44, %v263
    %v265 = vpop.f32.mrb[0].mxu0
    %v266 = vadd.f32 %v48, %v265
    %267 = vmatprep.mubr.f32.mxu0 0.0
    %268 = vmatmul.mubr.f32.gmra.mrb[0].mxu0 %v61
    %v269 = vpop.f32.mrb[0].mxu0
    %v270 = vadd.f32 %v44, %v269
    %v271 = vpop.f32.mrb[0].mxu0
    %v272 = vadd.f32 %v48, %v271
    %273 = vmatprep.mubr.f32.mxu0 0.0
    %274 = vmatmul.mubr.f32.gmra.mrb[0].mxu0 %v64
    %v275 = vpop.f32.mrb[0].mxu0
    %v276 = vadd.f32 %v44, %v275
    %v277 = vpop.f32.mrb[0].mxu0
    %v278 = vadd.f32 %v48, %v277
    %279 = vmatprep.mubr.f32.mxu0 0.0
    %280 = vmatmul.mubr.f32.gmra.mrb[0].mxu0 %v67
    %v281 = vpop.f32.mrb[0].mxu0
    %v282 = vadd.f32 %v44, %v281
    %v283 = vpop.f32.mrb[0].mxu0
    %v284 = vadd.f32 %v48, %v283
    %285 = vmatprep.mubr.f32.mxu0 0.0
    %286 = vmatmul.mubr.f32.gmra.mrb[0].mxu0 %v70
    %v287 = vpop.f32.mrb[0].mxu0
    %v288 = vadd.f32 %v44, %v287
    %v289 = vpop.f32.mrb[0].mxu0
    %v290 = vadd.f32 %v48, %v289
    %291 = vmatprep.mubr.f32.mxu0 0.0
    %292 = vmatmul.mubr.f32.gmra.mrb[0].mxu0 %v73
    %v293 = vpop.f32.mrb[0].mxu0
    %v294 = vadd.f32 %v44, %v293
    %v295 = vpop.f32.mrb[0].mxu0
    %v296 = vadd.f32 %v48, %v295
    %297 = vmatprep.mubr.f32.mxu0 0.0
    %298 = vmatmul.mubr.f32.gmra.mrb[0].mxu0 %v76
    %v299 = vpop.f32.mrb[0].mxu0
    %v300 = vadd.f32 %v44, %v299
    %v301 = vpop.f32.mrb[0].mxu0
    %v302 = vadd.f32 %v48, %v301
    %303 = vdwg.mxu0
    %304 = vst [vmem:[#allocation2] sm:$0xff] %v145
    %305 = vst [vmem:[#allocation2 + $0x8] sm:$0xff] %v147
    %306 = vst [vmem:[#allocation2 + $0x10] sm:$0xff] %v258
    %307 = vst [vmem:[#allocation2 + $0x18] sm:$0xff] %v260
    %308 = vst [vmem:[#allocation2 + $0x20] sm:$0xff] %v151
    %309 = vst [vmem:[#allocation2 + $0x28] sm:$0xff] %v153
    %310 = vst [vmem:[#allocation2 + $0x30] sm:$0xff] %v264
    %311 = vst [vmem:[#allocation2 + $0x38] sm:$0xff] %v266
    %312 = vst [vmem:[#allocation2 + $0x40] sm:$0xff] %v157
    %313 = vst [vmem:[#allocation2 + $0x48] sm:$0xff] %v159
    %314 = vst [vmem:[#allocation2 + $0x50] sm:$0xff] %v270
    %315 = vst [vmem:[#allocation2 + $0x58] sm:$0xff] %v272
    %316 = vst [vmem:[#allocation2 + $0x60] sm:$0xff] %v163
    %317 = vst [vmem:[#allocation2 + $0x68] sm:$0xff] %v165
    %318 = vst [vmem:[#allocation2 + $0x70] sm:$0xff] %v276
    %319 = vst [vmem:[#allocation2 + $0x78] sm:$0xff] %v278
    %320 = vst [vmem:[#allocation2 + $0x80] sm:$0xff] %v169
    %321 = vst [vmem:[#allocation2 + $0x88] sm:$0xff] %v171
    %322 = vst [vmem:[#allocation2 + $0x90] sm:$0xff] %v282
    %323 = vst [vmem:[#allocation2 + $0x98] sm:$0xff] %v284
    %324 = vst [vmem:[#allocation2 + $0xa0] sm:$0xff] %v175
    %325 = vst [vmem:[#allocation2 + $0xa8] sm:$0xff] %v177
    %326 = vst [vmem:[#allocation2 + $0xb0] sm:$0xff] %v288
    %327 = vst [vmem:[#allocation2 + $0xb8] sm:$0xff] %v290
    %328 = vst [vmem:[#allocation2 + $0xc0] sm:$0xff] %v181
    %329 = vst [vmem:[#allocation2 + $0xc8] sm:$0xff] %v183
    %330 = vst [vmem:[#allocation2 + $0xd0] sm:$0xff] %v294
    %331 = vst [vmem:[#allocation2 + $0xd8] sm:$0xff] %v296
    %332 = vst [vmem:[#allocation2 + $0xe0] sm:$0xff] %v187
    %333 = vst [vmem:[#allocation2 + $0xe8] sm:$0xff] %v189
    %334 = vst [vmem:[#allocation2 + $0xf0] sm:$0xff] %v300
    %335 = vst [vmem:[#allocation2 + $0xf8] sm:$0xff] %v302
    // Predicated region
    $region14: #{tpu_custom_call.1} parent=1 // pred_check
      _
    $region15: #{tpu_custom_call.1} parent=1 // pred_check_branch
      %337 = sbr.rel (0) target = $region17
    $region16: #{tpu_custom_call.1} parent=1 // pred_region
      %s339 = ssub.s32 4096, 4096
      %340 = vsyncadd [#allocation3], %s339
      %s341 = sshll.u32 [#allocation2], 4
      %s342 = int_to_ptr.vmem [resolvable:$true] %s341
      %347 = dma.vmem_to_hbm [thread:$0]  %s342, 4096, %s3, [#allocation3], 512, 512, 32
    $region17: #{tpu_custom_call.1} parent=1 // pred_fallthru
      _
    // Predicated region
    $region18: #{tpu_custom_call.1} parent=1 // pred_check
      _
    $region19: #{tpu_custom_call.1} parent=1 // pred_check_branch
      %349 = sbr.rel (0) target = $region21
    $region20: #{tpu_custom_call.1} parent=1 // pred_region
      %350 = dma.done [#allocation3], 4096
    $region21: #{tpu_custom_call.1} parent=1 // pred_fallthru
      _
    %351 = vsyncpa [#allocation3], 1

// kernel: tpu_custom_call.1
$region0: #{tpu_custom_call.1}
  #allocation0 [shape = 'u32[]', space=smem, size = 0x4, offset = 0x4, fixed_abs, tag = 'smem constant byte address 0x4 - core index']
  #allocation1 [shape = 'u32[144,128]{1,0:T(1,128)}', space=vmem, size = 0x12000, scoped, tag = 'internal scratch']
  %s0 = inlined_call_operand.vmem [shape: f32[64,16], index: 0, kind: input, shape index: {}]
  %s1 = inlined_call_operand.vmem [shape: f32[16,512], index: 1, kind: input, shape index: {}]
  %s2 = inlined_call_operand.vmem [shape: f32[1,512], index: 2, kind: input, shape index: {}]
  %s3 = inlined_call_operand.hbm [shape: f32[64,512], index: 3, kind: output, shape index: {}]
  %s4 = sld [smem:[#allocation0]]
  $region22: #{tpu_custom_call.1} parent=0
    _
  %s6 = ssub.s32 1, %s4
  %s7 = scalar_select 0, %s6, %s4
  $region1: #{tpu_custom_call.1} parent=0
    #allocation2 [shape = 'u8[131072]{0}', space=vmem, size = 0x20000, scoped, tag = 'output window, operand 0, single buffered']
    #allocation3 [shape = 's32[1]{0}', space=sflag, size = 0x4, scoped, tag = 'scoped memory for tpu_custom_call.1']
    %8 = vsyncpa [#allocation3], 0
    // Predicated region
    $region2: #{tpu_custom_call.1} parent=1 // pred_check
      _
    $region3: #{tpu_custom_call.1} parent=1 // pred_check_branch
      %10 = sbr.rel (0) target = $region5
    $region4: #{tpu_custom_call.1} parent=1 // pred_region
      _
    $region5: #{tpu_custom_call.1} parent=1 // pred_fallthru
      _
    // Predicated region
    $region6: #{tpu_custom_call.1} parent=1 // pred_check
      _
    $region7: #{tpu_custom_call.1} parent=1 // pred_check_branch
      %12 = sbr.rel (0) target = $region9
    $region8: #{tpu_custom_call.1} parent=1 // pred_region
      _
    $region9: #{tpu_custom_call.1} parent=1 // pred_fallthru
      _
    // Predicated region
    $region10: #{tpu_custom_call.1} parent=1 // pred_check
      _
    $region11: #{tpu_custom_call.1} parent=1 // pred_check_branch
      %14 = sbr.rel (0) target = $region13
    $region12: #{tpu_custom_call.1} parent=1 // pred_region
      _
    $region13: #{tpu_custom_call.1} parent=1 // pred_fallthru
      _
    %v15 = vld [vmem:[%s0] sm:$0xff]
    %v16 = vld [vmem:[%s0 + $0x8] sm:$0xff]
    %v17 = vld [vmem:[%s0 + $0x10] sm:$0xff]
    %v18 = vld [vmem:[%s0 + $0x18] sm:$0xff]
    %v19 = vld [vmem:[%s0 + $0x20] sm:$0xff]
    %v20 = vld [vmem:[%s0 + $0x28] sm:$0xff]
    %v21 = vld [vmem:[%s0 + $0x30] sm:$0xff]
    %v22 = vld [vmem:[%s0 + $0x38] sm:$0xff]
    %v23 = vld [vmem:[%s1] sm:$0xff]
    %v24 = vld [vmem:[%s1 + $0x8] sm:$0xff]
    %v25 = vld [vmem:[%s1 + $0x10] sm:$0xff]
    %v26 = vld [vmem:[%s1 + $0x18] sm:$0xff]
    %v27 = vld [vmem:[%s1 + $0x20] sm:$0xff]
    %v28 = vld [vmem:[%s1 + $0x28] sm:$0xff]
    %v29 = vld [vmem:[%s1 + $0x30] sm:$0xff]
    %v30 = vld [vmem:[%s1 + $0x38] sm:$0xff]
    %v31 = vld [vmem:[%s2] sm:$0xf]
    %v33 = vlaneseq
    %v34 = vshrl.u32 %v33, 7
    %v35 = vsub.s32 0, %v34
    %v36 = vrot.slane %v31, %v35
    %v37 = vlaneseq
    %v38 = vshrl.u32 %v37, 7
    %v39 = vsub.s32 1, %v38
    %v40 = vrot.slane %v31, %v39
    %v41 = vlaneseq
    %v42 = vshrl.u32 %v41, 7
    %v43 = vsub.s32 2, %v42
    %v44 = vrot.slane %v31, %v43
    %v45 = vlaneseq
    %v46 = vshrl.u32 %v45, 7
    %v47 = vsub.s32 3, %v46
    %v48 = vrot.slane %v31, %v47
    %vm53 = vcmask 130048
    %v55 = vsel %vm53, %v15, 0
    %v58 = vsel %vm53, %v16, 0
    %v61 = vsel %vm53, %v17, 0
    %v64 = vsel %vm53, %v18, 0
    %v67 = vsel %vm53, %v19, 0
    %v70 = vsel %vm53, %v20, 0
    %v73 = vsel %vm53, %v21, 0
    %v76 = vsel %vm53, %v22, 0
    %78 = vmatprep.subr.mxu0 %v24
    %79 = vmatpush1.msra.mxu0 %v23
    %80 = vmatprep.subr.mxu0 %v28
    %81 = vmatpush1.msra.mxu0 %v27
    %82 = vmatprep.subr.mxu0 0.0
    %83 = vmatpush1.msra.mxu0 0.0
    %84 = vmatprep.subr.mxu0 0.0
    %85 = vmatpush1.msra.mxu0 0.0
    %86 = vmatprep.subr.mxu0 0.0
    %87 = vmatpush1.msra.mxu0 0.0
    %88 = vmatprep.subr.mxu0 0.0
    %89 = vmatpush1.msra.mxu0 0.0
    %90 = vmatprep.subr.mxu0 0.0
    %91 = vmatpush1.msra.mxu0 0.0
    %92 = vmatprep.subr.mxu0 0.0
    %93 = vmatpush1.msra.mxu0 0.0
    %94 = vmatprep.subr.mxu0 0.0
    %95 = vmatpush1.msra.mxu0 0.0
    %96 = vmatprep.subr.mxu0 0.0
    %97 = vmatpush1.msra.mxu0 0.0
    %98 = vmatprep.subr.mxu0 0.0
    %99 = vmatpush1.msra.mxu0 0.0
    %100 = vmatprep.subr.mxu0 0.0
    %101 = vmatpush1.msra.mxu0 0.0
    %102 = vmatprep.subr.mxu0 0.0
    %103 = vmatpush1.msra.mxu0 0.0
    %104 = vmatprep.subr.mxu0 0.0
    %105 = vmatpush1.msra.mxu0 0.0
    %106 = vmatprep.subr.mxu0 0.0
    %107 = vmatpush1.msra.mxu0 0.0
    %108 = vmatprep.subr.mxu0 0.0
    %109 = vmatpush1.msra.mxu0 0.0
    %110 = vmatprep.subr.mxu0 0.0
    %111 = vmatpush1.msra.mxu0 0.0
    %112 = vmatprep.subr.mxu0 0.0
    %113 = vmatpush1.msra.mxu0 0.0
    %114 = vmatprep.subr.mxu0 0.0
    %115 = vmatpush1.msra.mxu0 0.0
    %116 = vmatprep.subr.mxu0 0.0
    %117 = vmatpush1.msra.mxu0 0.0
    %118 = vmatprep.subr.mxu0 0.0
    %119 = vmatpush1.msra.mxu0 0.0
    %120 = vmatprep.subr.mxu0 0.0
    %121 = vmatpush1.msra.mxu0 0.0
    %122 = vmatprep.subr.mxu0 0.0
    %123 = vmatpush1.msra.mxu0 0.0
    %124 = vmatprep.subr.mxu0 0.0
    %125 = vmatpush1.msra.mxu0 0.0
    %126 = vmatprep.subr.mxu0 0.0
    %127 = vmatpush1.msra.mxu0 0.0
    %128 = vmatprep.subr.mxu0 0.0
    %129 = vmatpush1.msra.mxu0 0.0
    %130 = vmatprep.subr.mxu0 0.0
    %131 = vmatpush1.msra.mxu0 0.0
    %132 = vmatprep.subr.mxu0 0.0
    %133 = vmatpush1.msra.mxu0 0.0
    %134 = vmatprep.subr.mxu0 0.0
    %135 = vmatpush1.msra.mxu0 0.0
    %136 = vmatprep.subr.mxu0 0.0
    %137 = vmatpush1.msra.mxu0 0.0
    %138 = vmatprep.subr.mxu0 0.0
    %139 = vmatpush1.msra.mxu0 0.0
    %140 = vmatprep.subr.mxu0 0.0
    %141 = vmatpush1.msra.mxu0 0.0
    %142 = vmatprep.mubr.f32.mxu0 0.0
    %143 = vmatmul.mubr.f32.gmra.mrb[0].mxu0 %v55
    %v144 = vpop.f32.mrb[0].mxu0
    %v145 = vadd.f32 %v36, %v144
    %v146 = vpop.f32.mrb[0].mxu0
    %v147 = vadd.f32 %v40, %v146
    %148 = vmatprep.mubr.f32.mxu0 0.0
    %149 = vmatmul.mubr.f32.gmra.mrb[0].mxu0 %v58
    %v150 = vpop.f32.mrb[0].mxu0
    %v151 = vadd.f32 %v36, %v150
    %v152 = vpop.f32.mrb[0].mxu0
    %v153 = vadd.f32 %v40, %v152
    %154 = vmatprep.mubr.f32.mxu0 0.0
    %155 = vmatmul.mubr.f32.gmra.mrb[0].mxu0 %v61
    %v156 = vpop.f32.mrb[0].mxu0
    %v157 = vadd.f32 %v36, %v156
    %v158 = vpop.f32.mrb[0].mxu0
    %v159 = vadd.f32 %v40, %v158
    %160 = vmatprep.mubr.f32.mxu0 0.0
    %161 = vmatmul.mubr.f32.gmra.mrb[0].mxu0 %v64
    %v162 = vpop.f32.mrb[0].mxu0
    %v163 = vadd.f32 %v36, %v162
    %v164 = vpop.f32.mrb[0].mxu0
    %v165 = vadd.f32 %v40, %v164
    %166 = vmatprep.mubr.f32.mxu0 0.0
    %167 = vmatmul.mubr.f32.gmra.mrb[0].mxu0 %v67
    %v168 = vpop.f32.mrb[0].mxu0
    %v169 = vadd.f32 %v36, %v168
    %v170 = vpop.f32.mrb[0].mxu0
    %v171 = vadd.f32 %v40, %v170
    %172 = vmatprep.mubr.f32.mxu0 0.0
    %173 = vmatmul.mubr.f32.gmra.mrb[0].mxu0 %v70
    %v174 = vpop.f32.mrb[0].mxu0
    %v175 = vadd.f32 %v36, %v174
    %v176 = vpop.f32.mrb[0].mxu0
    %v177 = vadd.f32 %v40, %v176
    %178 = vmatprep.mubr.f32.mxu0 0.0
    %179 = vmatmul.mubr.f32.gmra.mrb[0].mxu0 %v73
    %v180 = vpop.f32.mrb[0].mxu0
    %v181 = vadd.f32 %v36, %v180
    %v182 = vpop.f32.mrb[0].mxu0
    %v183 = vadd.f32 %v40, %v182
    %184 = vmatprep.mubr.f32.mxu0 0.0
    %185 = vmatmul.mubr.f32.gmra.mrb[0].mxu0 %v76
    %v186 = vpop.f32.mrb[0].mxu0
    %v187 = vadd.f32 %v36, %v186
    %v188 = vpop.f32.mrb[0].mxu0
    %v189 = vadd.f32 %v40, %v188
    %190 = vdwg.mxu0
    %191 = vmatprep.subr.mxu0 %v26
    %192 = vmatpush1.msra.mxu0 %v25
    %193 = vmatprep.subr.mxu0 %v30
    %194 = vmatpush1.msra.mxu0 %v29
    %195 = vmatprep.subr.mxu0 0.0
    %196 = vmatpush1.msra.mxu0 0.0
    %197 = vmatprep.subr.mxu0 0.0
    %198 = vmatpush1.msra.mxu0 0.0
    %199 = vmatprep.subr.mxu0 0.0
    %200 = vmatpush1.msra.mxu0 0.0
    %201 = vmatprep.subr.mxu0 0.0
    %202 = vmatpush1.msra.mxu0 0.0
    %203 = vmatprep.subr.mxu0 0.0
    %204 = vmatpush1.msra.mxu0 0.0
    %205 = vmatprep.subr.mxu0 0.0
    %206 = vmatpush1.msra.mxu0 0.0
    %207 = vmatprep.subr.mxu0 0.0
    %208 = vmatpush1.msra.mxu0 0.0
    %209 = vmatprep.subr.mxu0 0.0
    %210 = vmatpush1.msra.mxu0 0.0
    %211 = vmatprep.subr.mxu0 0.0
    %212 = vmatpush1.msra.mxu0 0.0
    %213 = vmatprep.subr.mxu0 0.0
    %214 = vmatpush1.msra.mxu0 0.0
    %215 = vmatprep.subr.mxu0 0.0
    %216 = vmatpush1.msra.mxu0 0.0
    %217 = vmatprep.subr.mxu0 0.0
    %218 = vmatpush1.msra.mxu0 0.0
    %219 = vmatprep.subr.mxu0 0.0
    %220 = vmatpush1.msra.mxu0 0.0
    %221 = vmatprep.subr.mxu0 0.0
    %222 = vmatpush1.msra.mxu0 0.0
    %223 = vmatprep.subr.mxu0 0.0
    %224 = vmatpush1.msra.mxu0 0.0
    %225 = vmatprep.subr.mxu0 0.0
    %226 = vmatpush1.msra.mxu0 0.0
    %227 = vmatprep.subr.mxu0 0.0
    %228 = vmatpush1.msra.mxu0 0.0
    %229 = vmatprep.subr.mxu0 0.0
    %230 = vmatpush1.msra.mxu0 0.0
    %231 = vmatprep.subr.mxu0 0.0
    %232 = vmatpush1.msra.mxu0 0.0
    %233 = vmatprep.subr.mxu0 0.0
    %234 = vmatpush1.msra.mxu0 0.0
    %235 = vmatprep.subr.mxu0 0.0
    %236 = vmatpush1.msra.mxu0 0.0
    %237 = vmatprep.subr.mxu0 0.0
    %238 = vmatpush1.msra.mxu0 0.0
    %239 = vmatprep.subr.mxu0 0.0
    %240 = vmatpush1.msra.mxu0 0.0
    %241 = vmatprep.subr.mxu0 0.0
    %242 = vmatpush1.msra.mxu0 0.0
    %243 = vmatprep.subr.mxu0 0.0
    %244 = vmatpush1.msra.mxu0 0.0
    %245 = vmatprep.subr.mxu0 0.0
    %246 = vmatpush1.msra.mxu0 0.0
    %247 = vmatprep.subr.mxu0 0.0
    %248 = vmatpush1.msra.mxu0 0.0
    %249 = vmatprep.subr.mxu0 0.0
    %250 = vmatpush1.msra.mxu0 0.0
    %251 = vmatprep.subr.mxu0 0.0
    %252 = vmatpush1.msra.mxu0 0.0
    %253 = vmatprep.subr.mxu0 0.0
    %254 = vmatpush1.msra.mxu0 0.0
    %255 = vmatprep.mubr.f32.mxu0 0.0
    %256 = vmatmul.mubr.f32.gmra.mrb[0].mxu0 %v55
    %v257 = vpop.f32.mrb[0].mxu0
    %v258 = vadd.f32 %v44, %v257
    %v259 = vpop.f32.mrb[0].mxu0
    %v260 = vadd.f32 %v48, %v259
    %261 = vmatprep.mubr.f32.mxu0 0.0
    %262 = vmatmul.mubr.f32.gmra.mrb[0].mxu0 %v58
    %v263 = vpop.f32.mrb[0].mxu0
    %v264 = vadd.f32 %v44, %v263
    %v265 = vpop.f32.mrb[0].mxu0
    %v266 = vadd.f32 %v48, %v265
    %267 = vmatprep.mubr.f32.mxu0 0.0
    %268 = vmatmul.mubr.f32.gmra.mrb[0].mxu0 %v61
    %v269 = vpop.f32.mrb[0].mxu0
    %v270 = vadd.f32 %v44, %v269
    %v271 = vpop.f32.mrb[0].mxu0
    %v272 = vadd.f32 %v48, %v271
    %273 = vmatprep.mubr.f32.mxu0 0.0
    %274 = vmatmul.mubr.f32.gmra.mrb[0].mxu0 %v64
    %v275 = vpop.f32.mrb[0].mxu0
    %v276 = vadd.f32 %v44, %v275
    %v277 = vpop.f32.mrb[0].mxu0
    %v278 = vadd.f32 %v48, %v277
    %279 = vmatprep.mubr.f32.mxu0 0.0
    %280 = vmatmul.mubr.f32.gmra.mrb[0].mxu0 %v67
    %v281 = vpop.f32.mrb[0].mxu0
    %v282 = vadd.f32 %v44, %v281
    %v283 = vpop.f32.mrb[0].mxu0
    %v284 = vadd.f32 %v48, %v283
    %285 = vmatprep.mubr.f32.mxu0 0.0
    %286 = vmatmul.mubr.f32.gmra.mrb[0].mxu0 %v70
    %v287 = vpop.f32.mrb[0].mxu0
    %v288 = vadd.f32 %v44, %v287
    %v289 = vpop.f32.mrb[0].mxu0
    %v290 = vadd.f32 %v48, %v289
    %291 = vmatprep.mubr.f32.mxu0 0.0
    %292 = vmatmul.mubr.f32.gmra.mrb[0].mxu0 %v73
    %v293 = vpop.f32.mrb[0].mxu0
    %v294 = vadd.f32 %v44, %v293
    %v295 = vpop.f32.mrb[0].mxu0
    %v296 = vadd.f32 %v48, %v295
    %297 = vmatprep.mubr.f32.mxu0 0.0
    %298 = vmatmul.mubr.f32.gmra.mrb[0].mxu0 %v76
    %v299 = vpop.f32.mrb[0].mxu0
    %v300 = vadd.f32 %v44, %v299
    %v301 = vpop.f32.mrb[0].mxu0
    %v302 = vadd.f32 %v48, %v301
    %303 = vdwg.mxu0
    %304 = vst [vmem:[#allocation2] sm:$0xff] %v145
    %305 = vst [vmem:[#allocation2 + $0x8] sm:$0xff] %v147
    %306 = vst [vmem:[#allocation2 + $0x10] sm:$0xff] %v258
    %307 = vst [vmem:[#allocation2 + $0x18] sm:$0xff] %v260
    %308 = vst [vmem:[#allocation2 + $0x20] sm:$0xff] %v151
    %309 = vst [vmem:[#allocation2 + $0x28] sm:$0xff] %v153
    %310 = vst [vmem:[#allocation2 + $0x30] sm:$0xff] %v264
    %311 = vst [vmem:[#allocation2 + $0x38] sm:$0xff] %v266
    %312 = vst [vmem:[#allocation2 + $0x40] sm:$0xff] %v157
    %313 = vst [vmem:[#allocation2 + $0x48] sm:$0xff] %v159
    %314 = vst [vmem:[#allocation2 + $0x50] sm:$0xff] %v270
    %315 = vst [vmem:[#allocation2 + $0x58] sm:$0xff] %v272
    %316 = vst [vmem:[#allocation2 + $0x60] sm:$0xff] %v163
    %317 = vst [vmem:[#allocation2 + $0x68] sm:$0xff] %v165
    %318 = vst [vmem:[#allocation2 + $0x70] sm:$0xff] %v276
    %319 = vst [vmem:[#allocation2 + $0x78] sm:$0xff] %v278
    %320 = vst [vmem:[#allocation2 + $0x80] sm:$0xff] %v169
    %321 = vst [vmem:[#allocation2 + $0x88] sm:$0xff] %v171
    %322 = vst [vmem:[#allocation2 + $0x90] sm:$0xff] %v282
    %323 = vst [vmem:[#allocation2 + $0x98] sm:$0xff] %v284
    %324 = vst [vmem:[#allocation2 + $0xa0] sm:$0xff] %v175
    %325 = vst [vmem:[#allocation2 + $0xa8] sm:$0xff] %v177
    %326 = vst [vmem:[#allocation2 + $0xb0] sm:$0xff] %v288
    %327 = vst [vmem:[#allocation2 + $0xb8] sm:$0xff] %v290
    %328 = vst [vmem:[#allocation2 + $0xc0] sm:$0xff] %v181
    %329 = vst [vmem:[#allocation2 + $0xc8] sm:$0xff] %v183
    %330 = vst [vmem:[#allocation2 + $0xd0] sm:$0xff] %v294
    %331 = vst [vmem:[#allocation2 + $0xd8] sm:$0xff] %v296
    %332 = vst [vmem:[#allocation2 + $0xe0] sm:$0xff] %v187
    %333 = vst [vmem:[#allocation2 + $0xe8] sm:$0xff] %v189
    %334 = vst [vmem:[#allocation2 + $0xf0] sm:$0xff] %v300
    %335 = vst [vmem:[#allocation2 + $0xf8] sm:$0xff] %v302
    // Predicated region
    $region14: #{tpu_custom_call.1} parent=1 // pred_check
      _
    $region15: #{tpu_custom_call.1} parent=1 // pred_check_branch
      %337 = sbr.rel (0) target = $region17
    $region16: #{tpu_custom_call.1} parent=1 // pred_region
      %s339 = ssub.s32 4096, 4096
      %340 = vsyncadd [#allocation3], %s339
      %s341 = sshll.u32 [#allocation2], 4
      %s342 = int_to_ptr.vmem [resolvable:$true] %s341
      %347 = dma.vmem_to_hbm [thread:$0]  %s342, 4096, %s3, [#allocation3], 512, 512, 32
    $region17: #{tpu_custom_call.1} parent=1 // pred_fallthru
      _
    // Predicated region
    $region18: #{tpu_custom_call.1} parent=1 // pred_check
      _
    $region19: #{tpu_custom_call.1} parent=1 // pred_check_branch
      %349 = sbr.rel (0) target = $region21
    $region20: #{tpu_custom_call.1} parent=1 // pred_region
      %350 = dma.done [#allocation3], 4096
    $region21: #{tpu_custom_call.1} parent=1 // pred_fallthru
      _
    %351 = vsyncpa [#allocation3], 1

</llo_original>
